<compile_context>
chip_gen: v6e
topology: v6e:2x2x1
jax: 0.10.0
libtpu: 0.0.40
codegen_flags: <defaults>
</compile_context>

<pallas_src>
import jax
import jax.numpy as jnp
from jax.experimental import pallas as pl
from jax.experimental.pallas import tpu as pltpu

BN_EPS = 1e-5     # torch.nn.BatchNorm1d default eps
MSG_EPS = 1e-7    # GENConv message eps
LANE = 128        # TPU lane width; channel axis is padded to a multiple of this


def fused_deepergcn_kernel(x_ref, ea_ref, s_ref, dt_ref, scale_ref, shift_ref,
                           w_ref, b_ref, t_ref, out_ref):
    """Whole DeeperGCN forward (L x DeepGCNLayer 'res+' GENConv-softmax) in one call."""
    L = w_ref.shape[0]          # static at trace time
    Cp = x_ref.shape[1]         # lane-padded channel count

    x = x_ref[...]                                                   # [N, Cp]

    # L is a small compile-time constant: a static Python loop produces the
    # fully-unrolled straight-line region the reviewer asked for (equivalent to
    # lax.fori_loop(unroll=True)) with zero-cost static parameter slices.
    for l in range(L):
        # res+ pre-transform: BatchNorm (eval, folded affine) -> ReLU -> dropout(0)
        h = jnp.maximum(x * scale_ref[l] + shift_ref[l], 0.0)        # [N, Cp]

        # GENConv message: gather x_j = h[src] via one-hot matmul (bf16 MXU,
        # f32 accumulate)
        h_src = jnp.dot(s_ref[...], h.astype(jnp.bfloat16),
                        preferred_element_type=jnp.float32)          # [E, Cp]
        msg = jnp.maximum(h_src + ea_ref[...], 0.0) + MSG_EPS        # [E, Cp]

        # Softmax aggregation per destination node (learnable temperature t).
        # No per-channel max shift: it cancels exactly in numer/denom; the
        # clamp only guards f32 exp overflow and never triggers for realistic
        # logits, so results match the unshifted softmax exactly.
        t = t_ref[l]
        expv = jnp.exp(jnp.minimum(t * msg, 80.0))                   # [E, Cp]

        # Fused scatter: one [N,E] @ [E,2Cp] MXU matmul (2Cp = 256 lanes fills
        # the v6e/v7x MXU); split result into denom / numer.
        packed = jnp.concatenate(
            [expv.astype(jnp.bfloat16), (expv * msg).astype(jnp.bfloat16)],
            axis=-1)                                                 # [E, 2Cp]
        nd = jnp.dot(dt_ref[...], packed,
                     preferred_element_type=jnp.float32)             # [N, 2Cp]
        denom = nd[:, :Cp]
        numer = nd[:, Cp:]
        agg = numer / jnp.maximum(denom, 1e-16)       # isolated nodes -> 0

        # add root + GENConv MLP (single Linear since num_trans_layers=1),
        # then the res+ skip connection
        out = jnp.dot(agg + h, w_ref[l],
                      preferred_element_type=jnp.float32) + b_ref[l]  # [N, Cp]
        x = x + out

    # epilogue: x = layers[0].act(layers[0].norm(x)); dropout(p=0, eval) no-op
    out_ref[...] = jnp.maximum(x * scale_ref[0] + shift_ref[0], 0.0)


def _pad_last(a, cp):
    pad = cp - a.shape[-1]
    if pad == 0:
        return a
    return jnp.pad(a, [(0, 0)] * (a.ndim - 1) + [(0, pad)])


def deepergcn_forward(x, edge_index, edge_attr, batch, params):
    del batch  # readout=None and num_pred_heads=None -> `batch` is unused
    N, C = x.shape
    E = edge_attr.shape[0]
    L = params["w"].shape[0]
    Cp = ((C + LANE - 1) // LANE) * LANE   # lane-dense channel axis

    src, dst = edge_index[0], edge_index[1]
    node_ids = jnp.arange(N, dtype=src.dtype)
    # Dense one-hot operators, each generated directly in its matmul layout
    # (no transpose/relayout of a materialized array):
    #   gather x[src]      == S  @ x    with S  [E, N]
    #   scatter-to-dst     == Dt @ (.)  with Dt [N, E]
    # {0,1} is exact in bf16; halves the footprint of the largest operands.
    S = (src[:, None] == node_ids[None, :]).astype(jnp.bfloat16)      # [E, N]
    Dt = (dst[None, :] == node_ids[:, None]).astype(jnp.bfloat16)     # [N, E]
    # TODO(synk): for production graph sizes replace the dense O(E*N) one-hot
    # operators with an index-based gather / segment-scatter path (scalar
    # prefetch of src/dst into SMEM + pl.Element row gather), add an innermost
    # E-tile grid axis (streamed [tE,*] slabs, tE a multiple of 128/256) for
    # v7x's 64 MiB VMEM, and split that axis 'parallel' across the 2 v7x TCs.

    # fold BatchNorm (eval: running stats) into a single affine
    scale = params["gamma"] * jax.lax.rsqrt(params["var"] + BN_EPS)   # [L,1,C]
    shift = params["beta"] - params["mean"] * scale                   # [L,1,C]

    # zero-pad the channel axis to 128 lanes (padded output lanes provably
    # stay zero because the padded rows/cols of W, b, scale, shift are zero)
    x_p = _pad_last(x, Cp)
    ea_p = _pad_last(edge_attr, Cp)
    scale_p = _pad_last(scale, Cp)
    shift_p = _pad_last(shift, Cp)
    b_p = _pad_last(params["b"], Cp)
    w_p = jnp.pad(params["w"], ((0, 0), (0, Cp - C), (0, Cp - C)))

    # VMEM budget derived from the actual resident slabs (+ live intermediates),
    # clamped to the chip's capacity when it can be queried.
    def nbytes(a):
        return int(a.size) * a.dtype.itemsize
    slab_bytes = sum(map(nbytes, (x_p, ea_p, S, Dt, scale_p, shift_p, w_p, b_p)))
    slab_bytes += 4 * N * Cp                       # output
    slab_bytes += 4 * (3 * E * Cp + 3 * N * Cp)    # largest live intermediates
    try:
        vmem_cap = int(pltpu.get_tpu_info().vmem_capacity_bytes)
    except Exception:
        vmem_cap = 64 << 20                        # conservative (v7x) fallback
    vmem_limit = int(min(max(2 * slab_bytes, 16 << 20), int(vmem_cap * 0.85)))

    flops = L * (2 * E * N * Cp            # gather matmul
                 + 4 * N * E * Cp          # fused scatter matmul ([N,E]@[E,2Cp])
                 + 2 * N * Cp * Cp         # GENConv MLP
                 + 12 * N * Cp + 8 * E * Cp)
    transcendentals = L * E * Cp
    bytes_accessed = (4 * (2 * N * Cp + E * Cp)            # x, out, edge_attr
                      + 2 * 2 * E * N                      # S, Dt (bf16)
                      + 4 * L * (Cp * Cp + 3 * Cp + 1))    # W, b, scale, shift, t

    vmem = pltpu.MemorySpace.VMEM
    out_p = pl.pallas_call(
        fused_deepergcn_kernel,
        out_shape=jax.ShapeDtypeStruct((N, Cp), jnp.float32),
        in_specs=[
            pl.BlockSpec(memory_space=vmem),                    # x      [N, Cp]
            pl.BlockSpec(memory_space=vmem),                    # e_attr [E, Cp]
            pl.BlockSpec(memory_space=vmem),                    # S      [E, N]
            pl.BlockSpec(memory_space=vmem),                    # Dt     [N, E]
            pl.BlockSpec(memory_space=vmem),                    # scale  [L,1,Cp]
            pl.BlockSpec(memory_space=vmem),                    # shift  [L,1,Cp]
            pl.BlockSpec(memory_space=vmem),                    # W      [L,Cp,Cp]
            pl.BlockSpec(memory_space=vmem),                    # b      [L,1,Cp]
            pl.BlockSpec(memory_space=pltpu.MemorySpace.SMEM),  # t      [L]
        ],
        out_specs=pl.BlockSpec(memory_space=vmem),
        compiler_params=pltpu.CompilerParams(vmem_limit_bytes=vmem_limit),
        cost_estimate=pl.CostEstimate(flops=int(flops),
                                      transcendentals=int(transcendentals),
                                      bytes_accessed=int(bytes_accessed)),
    )(x_p, ea_p, S, Dt, scale_p, shift_p, w_p, b_p, params["t"])

    # TODO(synk): readout='gru' (packed-sequence GRU), 'add'/'mean'/'max' pools
    # and pred_nn are not instantiated with the default ctor args reproduced here.
    return out_p[:, :C]


def init_params(key, num_layers, channels):
    """Deterministic parameter init mirroring reset_parameters() shapes,
    stacked along a leading [num_layers] axis for the fused kernel."""
    bound = 1.0 / float(channels) ** 0.5
    kw, kb = jax.random.split(key)
    return dict(
        # GENConv internal MLP: single Linear C->C per layer (stored [in, out])
        w=jax.random.uniform(kw, (num_layers, channels, channels),
                             jnp.float32, -bound, bound),
        b=jax.random.uniform(kb, (num_layers, 1, channels),
                             jnp.float32, -bound, bound),
        # learnable softmax temperature (learn_t=True, init 1.0)
        t=jnp.ones((num_layers,), jnp.float32),
        # BatchNorm parameters / running stats after reset_parameters()
        gamma=jnp.ones((num_layers, 1, channels), jnp.float32),
        beta=jnp.zeros((num_layers, 1, channels), jnp.float32),
        mean=jnp.zeros((num_layers, 1, channels), jnp.float32),
        var=jnp.ones((num_layers, 1, channels), jnp.float32),
    )


if __name__ == "__main__":
    key = jax.random.PRNGKey(0)
    N, E, C, L = 16, 48, 32, 3          # nodes, edges, channels, num_layers
    k1, k2, k3, kp = jax.random.split(key, 4)

    x = jax.random.normal(k1, (N, C), dtype=jnp.float32)
    edge_index = jax.random.randint(k2, (2, E), 0, N, dtype=jnp.int32)
    edge_attr = jax.random.normal(k3, (E, C), dtype=jnp.float32)
    batch = jnp.zeros((N,), dtype=jnp.int32)

    params = init_params(kp, L, C)

    out = jax.jit(deepergcn_forward)(x, edge_index, edge_attr, batch, params)
    out = jax.block_until_ready(out)
    assert out.shape == (N, C) and out.dtype == jnp.float32
    assert bool(jnp.all(jnp.isfinite(out)))
    print("KERNEL_OK")
</pallas_src>

<mosaic_0001>
module attributes {stable_mosaic.version = 11 : i64} {
  func.func @fused_deepergcn_kernel(%arg0: memref<16x128xf32, #tpu.memory_space<vmem>>, %arg1: memref<48x128xf32, #tpu.memory_space<vmem>>, %arg2: memref<48x16xbf16, #tpu.memory_space<vmem>>, %arg3: memref<16x48xbf16, #tpu.memory_space<vmem>>, %arg4: memref<3x1x128xf32, #tpu.memory_space<vmem>>, %arg5: memref<3x1x128xf32, #tpu.memory_space<vmem>>, %arg6: memref<3x128x128xf32, #tpu.memory_space<vmem>>, %arg7: memref<3x1x128xf32, #tpu.memory_space<vmem>>, %arg8: memref<3xf32, #tpu.memory_space<smem>>, %arg9: memref<16x128xf32, #tpu.memory_space<vmem>>) attributes {dimension_semantics = [], scalar_prefetch = 0 : i64, scratch_operands = 0 : i64, tpu.core_type = #tpu.core_type<tc>} {
    %c0 = arith.constant 0 : index
    %c0_0 = arith.constant 0 : index
    %0 = vector.load %arg0[%c0, %c0_0] : memref<16x128xf32, #tpu.memory_space<vmem>>, vector<16x128xf32>
    %c0_1 = arith.constant 0 : index
    %c0_2 = arith.constant 0 : index
    %c0_3 = arith.constant 0 : index
    %1 = vector.load %arg4[%c0_1, %c0_2, %c0_3] : memref<3x1x128xf32, #tpu.memory_space<vmem>>, vector<1x1x128xf32>
    %2 = vector.shape_cast %1 : vector<1x1x128xf32> to vector<1x128xf32>
    %3 = vector.broadcast %2 : vector<1x128xf32> to vector<16x128xf32>
    %4 = arith.mulf %0, %3 : vector<16x128xf32>
    %c0_4 = arith.constant 0 : index
    %c0_5 = arith.constant 0 : index
    %c0_6 = arith.constant 0 : index
    %5 = vector.load %arg5[%c0_4, %c0_5, %c0_6] : memref<3x1x128xf32, #tpu.memory_space<vmem>>, vector<1x1x128xf32>
    %6 = vector.shape_cast %5 : vector<1x1x128xf32> to vector<1x128xf32>
    %7 = vector.broadcast %6 : vector<1x128xf32> to vector<16x128xf32>
    %8 = arith.addf %4, %7 : vector<16x128xf32>
    %cst = arith.constant 0.000000e+00 : f32
    %9 = vector.broadcast %cst : f32 to vector<16x128xf32>
    %10 = arith.maximumf %8, %9 : vector<16x128xf32>
    %c0_7 = arith.constant 0 : index
    %c0_8 = arith.constant 0 : index
    %11 = vector.load %arg2[%c0_7, %c0_8] : memref<48x16xbf16, #tpu.memory_space<vmem>>, vector<48x16xbf16>
    %12 = arith.truncf %10 : vector<16x128xf32> to vector<16x128xbf16>
    %cst_9 = arith.constant dense<0.000000e+00> : vector<48x128xf32>
    %13 = tpu.matmul %11, %12, %cst_9 {dimension_numbers = #tpu.dot_dimension_numbers<[1], [0], [0], [1], [0, 0, 1, 1], [], []>} : vector<48x16xbf16>, vector<16x128xbf16>, vector<48x128xf32> -> vector<48x128xf32>
    %c0_10 = arith.constant 0 : index
    %c0_11 = arith.constant 0 : index
    %14 = vector.load %arg1[%c0_10, %c0_11] : memref<48x128xf32, #tpu.memory_space<vmem>>, vector<48x128xf32>
    %15 = arith.addf %13, %14 : vector<48x128xf32>
    %cst_12 = arith.constant 0.000000e+00 : f32
    %16 = vector.broadcast %cst_12 : f32 to vector<48x128xf32>
    %17 = arith.maximumf %15, %16 : vector<48x128xf32>
    %cst_13 = arith.constant 1.000000e-07 : f32
    %18 = vector.broadcast %cst_13 : f32 to vector<48x128xf32>
    %19 = arith.addf %17, %18 : vector<48x128xf32>
    %c0_14 = arith.constant 0 : index
    %20 = memref.load %arg8[%c0_14] : memref<3xf32, #tpu.memory_space<smem>>
    %21 = vector.broadcast %20 : f32 to vector<48x128xf32>
    %22 = arith.mulf %21, %19 : vector<48x128xf32>
    %cst_15 = arith.constant 8.000000e+01 : f32
    %23 = vector.broadcast %cst_15 : f32 to vector<48x128xf32>
    %24 = arith.minimumf %22, %23 : vector<48x128xf32>
    %25 = math.exp %24 : vector<48x128xf32>
    %26 = arith.truncf %25 : vector<48x128xf32> to vector<48x128xbf16>
    %27 = arith.mulf %25, %19 : vector<48x128xf32>
    %28 = arith.truncf %27 : vector<48x128xf32> to vector<48x128xbf16>
    %29 = tpu.concatenate %26, %28 in 1 : vector<48x128xbf16>, vector<48x128xbf16> -> vector<48x256xbf16>
    %c0_16 = arith.constant 0 : index
    %c0_17 = arith.constant 0 : index
    %30 = vector.load %arg3[%c0_16, %c0_17] : memref<16x48xbf16, #tpu.memory_space<vmem>>, vector<16x48xbf16>
    %cst_18 = arith.constant dense<0.000000e+00> : vector<16x256xf32>
    %31 = tpu.matmul %30, %29, %cst_18 {dimension_numbers = #tpu.dot_dimension_numbers<[1], [0], [0], [1], [0, 0, 1, 1], [], []>} : vector<16x48xbf16>, vector<48x256xbf16>, vector<16x256xf32> -> vector<16x256xf32>
    %32 = vector.extract_strided_slice %31 {offsets = [0, 0], sizes = [16, 128], strides = [1, 1]} : vector<16x256xf32> to vector<16x128xf32>
    %33 = vector.extract_strided_slice %31 {offsets = [0, 128], sizes = [16, 128], strides = [1, 1]} : vector<16x256xf32> to vector<16x128xf32>
    %cst_19 = arith.constant 1.000000e-16 : f32
    %34 = vector.broadcast %cst_19 : f32 to vector<16x128xf32>
    %35 = arith.maximumf %32, %34 : vector<16x128xf32>
    %36 = arith.divf %33, %35 : vector<16x128xf32>
    %37 = arith.addf %36, %10 : vector<16x128xf32>
    %c0_20 = arith.constant 0 : index
    %c0_21 = arith.constant 0 : index
    %c0_22 = arith.constant 0 : index
    %38 = vector.load %arg6[%c0_20, %c0_21, %c0_22] : memref<3x128x128xf32, #tpu.memory_space<vmem>>, vector<1x128x128xf32>
    %39 = vector.shape_cast %38 : vector<1x128x128xf32> to vector<128x128xf32>
    %cst_23 = arith.constant dense<0.000000e+00> : vector<16x128xf32>
    %40 = tpu.matmul %37, %39, %cst_23 {dimension_numbers = #tpu.dot_dimension_numbers<[1], [0], [0], [1], [0, 0, 1, 1], [], []>} : vector<16x128xf32>, vector<128x128xf32>, vector<16x128xf32> -> vector<16x128xf32>
    %c0_24 = arith.constant 0 : index
    %c0_25 = arith.constant 0 : index
    %c0_26 = arith.constant 0 : index
    %41 = vector.load %arg7[%c0_24, %c0_25, %c0_26] : memref<3x1x128xf32, #tpu.memory_space<vmem>>, vector<1x1x128xf32>
    %42 = vector.shape_cast %41 : vector<1x1x128xf32> to vector<1x128xf32>
    %43 = vector.broadcast %42 : vector<1x128xf32> to vector<16x128xf32>
    %44 = arith.addf %40, %43 : vector<16x128xf32>
    %45 = arith.addf %0, %44 : vector<16x128xf32>
    %c1 = arith.constant 1 : index
    %c0_27 = arith.constant 0 : index
    %c0_28 = arith.constant 0 : index
    %46 = vector.load %arg4[%c1, %c0_27, %c0_28] : memref<3x1x128xf32, #tpu.memory_space<vmem>>, vector<1x1x128xf32>
    %47 = vector.shape_cast %46 : vector<1x1x128xf32> to vector<1x128xf32>
    %48 = vector.broadcast %47 : vector<1x128xf32> to vector<16x128xf32>
    %49 = arith.mulf %45, %48 : vector<16x128xf32>
    %c1_29 = arith.constant 1 : index
    %c0_30 = arith.constant 0 : index
    %c0_31 = arith.constant 0 : index
    %50 = vector.load %arg5[%c1_29, %c0_30, %c0_31] : memref<3x1x128xf32, #tpu.memory_space<vmem>>, vector<1x1x128xf32>
    %51 = vector.shape_cast %50 : vector<1x1x128xf32> to vector<1x128xf32>
    %52 = vector.broadcast %51 : vector<1x128xf32> to vector<16x128xf32>
    %53 = arith.addf %49, %52 : vector<16x128xf32>
    %cst_32 = arith.constant 0.000000e+00 : f32
    %54 = vector.broadcast %cst_32 : f32 to vector<16x128xf32>
    %55 = arith.maximumf %53, %54 : vector<16x128xf32>
    %c0_33 = arith.constant 0 : index
    %c0_34 = arith.constant 0 : index
    %56 = vector.load %arg2[%c0_33, %c0_34] : memref<48x16xbf16, #tpu.memory_space<vmem>>, vector<48x16xbf16>
    %57 = arith.truncf %55 : vector<16x128xf32> to vector<16x128xbf16>
    %cst_35 = arith.constant dense<0.000000e+00> : vector<48x128xf32>
    %58 = tpu.matmul %56, %57, %cst_35 {dimension_numbers = #tpu.dot_dimension_numbers<[1], [0], [0], [1], [0, 0, 1, 1], [], []>} : vector<48x16xbf16>, vector<16x128xbf16>, vector<48x128xf32> -> vector<48x128xf32>
    %c0_36 = arith.constant 0 : index
    %c0_37 = arith.constant 0 : index
    %59 = vector.load %arg1[%c0_36, %c0_37] : memref<48x128xf32, #tpu.memory_space<vmem>>, vector<48x128xf32>
    %60 = arith.addf %58, %59 : vector<48x128xf32>
    %cst_38 = arith.constant 0.000000e+00 : f32
    %61 = vector.broadcast %cst_38 : f32 to vector<48x128xf32>
    %62 = arith.maximumf %60, %61 : vector<48x128xf32>
    %cst_39 = arith.constant 1.000000e-07 : f32
    %63 = vector.broadcast %cst_39 : f32 to vector<48x128xf32>
    %64 = arith.addf %62, %63 : vector<48x128xf32>
    %c1_40 = arith.constant 1 : index
    %65 = memref.load %arg8[%c1_40] : memref<3xf32, #tpu.memory_space<smem>>
    %66 = vector.broadcast %65 : f32 to vector<48x128xf32>
    %67 = arith.mulf %66, %64 : vector<48x128xf32>
    %cst_41 = arith.constant 8.000000e+01 : f32
    %68 = vector.broadcast %cst_41 : f32 to vector<48x128xf32>
    %69 = arith.minimumf %67, %68 : vector<48x128xf32>
    %70 = math.exp %69 : vector<48x128xf32>
    %71 = arith.truncf %70 : vector<48x128xf32> to vector<48x128xbf16>
    %72 = arith.mulf %70, %64 : vector<48x128xf32>
    %73 = arith.truncf %72 : vector<48x128xf32> to vector<48x128xbf16>
    %74 = tpu.concatenate %71, %73 in 1 : vector<48x128xbf16>, vector<48x128xbf16> -> vector<48x256xbf16>
    %c0_42 = arith.constant 0 : index
    %c0_43 = arith.constant 0 : index
    %75 = vector.load %arg3[%c0_42, %c0_43] : memref<16x48xbf16, #tpu.memory_space<vmem>>, vector<16x48xbf16>
    %cst_44 = arith.constant dense<0.000000e+00> : vector<16x256xf32>
    %76 = tpu.matmul %75, %74, %cst_44 {dimension_numbers = #tpu.dot_dimension_numbers<[1], [0], [0], [1], [0, 0, 1, 1], [], []>} : vector<16x48xbf16>, vector<48x256xbf16>, vector<16x256xf32> -> vector<16x256xf32>
    %77 = vector.extract_strided_slice %76 {offsets = [0, 0], sizes = [16, 128], strides = [1, 1]} : vector<16x256xf32> to vector<16x128xf32>
    %78 = vector.extract_strided_slice %76 {offsets = [0, 128], sizes = [16, 128], strides = [1, 1]} : vector<16x256xf32> to vector<16x128xf32>
    %cst_45 = arith.constant 1.000000e-16 : f32
    %79 = vector.broadcast %cst_45 : f32 to vector<16x128xf32>
    %80 = arith.maximumf %77, %79 : vector<16x128xf32>
    %81 = arith.divf %78, %80 : vector<16x128xf32>
    %82 = arith.addf %81, %55 : vector<16x128xf32>
    %c1_46 = arith.constant 1 : index
    %c0_47 = arith.constant 0 : index
    %c0_48 = arith.constant 0 : index
    %83 = vector.load %arg6[%c1_46, %c0_47, %c0_48] : memref<3x128x128xf32, #tpu.memory_space<vmem>>, vector<1x128x128xf32>
    %84 = vector.shape_cast %83 : vector<1x128x128xf32> to vector<128x128xf32>
    %cst_49 = arith.constant dense<0.000000e+00> : vector<16x128xf32>
    %85 = tpu.matmul %82, %84, %cst_49 {dimension_numbers = #tpu.dot_dimension_numbers<[1], [0], [0], [1], [0, 0, 1, 1], [], []>} : vector<16x128xf32>, vector<128x128xf32>, vector<16x128xf32> -> vector<16x128xf32>
    %c1_50 = arith.constant 1 : index
    %c0_51 = arith.constant 0 : index
    %c0_52 = arith.constant 0 : index
    %86 = vector.load %arg7[%c1_50, %c0_51, %c0_52] : memref<3x1x128xf32, #tpu.memory_space<vmem>>, vector<1x1x128xf32>
    %87 = vector.shape_cast %86 : vector<1x1x128xf32> to vector<1x128xf32>
    %88 = vector.broadcast %87 : vector<1x128xf32> to vector<16x128xf32>
    %89 = arith.addf %85, %88 : vector<16x128xf32>
    %90 = arith.addf %45, %89 : vector<16x128xf32>
    %c2 = arith.constant 2 : index
    %c0_53 = arith.constant 0 : index
    %c0_54 = arith.constant 0 : index
    %91 = vector.load %arg4[%c2, %c0_53, %c0_54] : memref<3x1x128xf32, #tpu.memory_space<vmem>>, vector<1x1x128xf32>
    %92 = vector.shape_cast %91 : vector<1x1x128xf32> to vector<1x128xf32>
    %93 = vector.broadcast %92 : vector<1x128xf32> to vector<16x128xf32>
    %94 = arith.mulf %90, %93 : vector<16x128xf32>
    %c2_55 = arith.constant 2 : index
    %c0_56 = arith.constant 0 : index
    %c0_57 = arith.constant 0 : index
    %95 = vector.load %arg5[%c2_55, %c0_56, %c0_57] : memref<3x1x128xf32, #tpu.memory_space<vmem>>, vector<1x1x128xf32>
    %96 = vector.shape_cast %95 : vector<1x1x128xf32> to vector<1x128xf32>
    %97 = vector.broadcast %96 : vector<1x128xf32> to vector<16x128xf32>
    %98 = arith.addf %94, %97 : vector<16x128xf32>
    %cst_58 = arith.constant 0.000000e+00 : f32
    %99 = vector.broadcast %cst_58 : f32 to vector<16x128xf32>
    %100 = arith.maximumf %98, %99 : vector<16x128xf32>
    %c0_59 = arith.constant 0 : index
    %c0_60 = arith.constant 0 : index
    %101 = vector.load %arg2[%c0_59, %c0_60] : memref<48x16xbf16, #tpu.memory_space<vmem>>, vector<48x16xbf16>
    %102 = arith.truncf %100 : vector<16x128xf32> to vector<16x128xbf16>
    %cst_61 = arith.constant dense<0.000000e+00> : vector<48x128xf32>
    %103 = tpu.matmul %101, %102, %cst_61 {dimension_numbers = #tpu.dot_dimension_numbers<[1], [0], [0], [1], [0, 0, 1, 1], [], []>} : vector<48x16xbf16>, vector<16x128xbf16>, vector<48x128xf32> -> vector<48x128xf32>
    %c0_62 = arith.constant 0 : index
    %c0_63 = arith.constant 0 : index
    %104 = vector.load %arg1[%c0_62, %c0_63] : memref<48x128xf32, #tpu.memory_space<vmem>>, vector<48x128xf32>
    %105 = arith.addf %103, %104 : vector<48x128xf32>
    %cst_64 = arith.constant 0.000000e+00 : f32
    %106 = vector.broadcast %cst_64 : f32 to vector<48x128xf32>
    %107 = arith.maximumf %105, %106 : vector<48x128xf32>
    %cst_65 = arith.constant 1.000000e-07 : f32
    %108 = vector.broadcast %cst_65 : f32 to vector<48x128xf32>
    %109 = arith.addf %107, %108 : vector<48x128xf32>
    %c2_66 = arith.constant 2 : index
    %110 = memref.load %arg8[%c2_66] : memref<3xf32, #tpu.memory_space<smem>>
    %111 = vector.broadcast %110 : f32 to vector<48x128xf32>
    %112 = arith.mulf %111, %109 : vector<48x128xf32>
    %cst_67 = arith.constant 8.000000e+01 : f32
    %113 = vector.broadcast %cst_67 : f32 to vector<48x128xf32>
    %114 = arith.minimumf %112, %113 : vector<48x128xf32>
    %115 = math.exp %114 : vector<48x128xf32>
    %116 = arith.truncf %115 : vector<48x128xf32> to vector<48x128xbf16>
    %117 = arith.mulf %115, %109 : vector<48x128xf32>
    %118 = arith.truncf %117 : vector<48x128xf32> to vector<48x128xbf16>
    %119 = tpu.concatenate %116, %118 in 1 : vector<48x128xbf16>, vector<48x128xbf16> -> vector<48x256xbf16>
    %c0_68 = arith.constant 0 : index
    %c0_69 = arith.constant 0 : index
    %120 = vector.load %arg3[%c0_68, %c0_69] : memref<16x48xbf16, #tpu.memory_space<vmem>>, vector<16x48xbf16>
    %cst_70 = arith.constant dense<0.000000e+00> : vector<16x256xf32>
    %121 = tpu.matmul %120, %119, %cst_70 {dimension_numbers = #tpu.dot_dimension_numbers<[1], [0], [0], [1], [0, 0, 1, 1], [], []>} : vector<16x48xbf16>, vector<48x256xbf16>, vector<16x256xf32> -> vector<16x256xf32>
    %122 = vector.extract_strided_slice %121 {offsets = [0, 0], sizes = [16, 128], strides = [1, 1]} : vector<16x256xf32> to vector<16x128xf32>
    %123 = vector.extract_strided_slice %121 {offsets = [0, 128], sizes = [16, 128], strides = [1, 1]} : vector<16x256xf32> to vector<16x128xf32>
    %cst_71 = arith.constant 1.000000e-16 : f32
    %124 = vector.broadcast %cst_71 : f32 to vector<16x128xf32>
    %125 = arith.maximumf %122, %124 : vector<16x128xf32>
    %126 = arith.divf %123, %125 : vector<16x128xf32>
    %127 = arith.addf %126, %100 : vector<16x128xf32>
    %c2_72 = arith.constant 2 : index
    %c0_73 = arith.constant 0 : index
    %c0_74 = arith.constant 0 : index
    %128 = vector.load %arg6[%c2_72, %c0_73, %c0_74] : memref<3x128x128xf32, #tpu.memory_space<vmem>>, vector<1x128x128xf32>
    %129 = vector.shape_cast %128 : vector<1x128x128xf32> to vector<128x128xf32>
    %cst_75 = arith.constant dense<0.000000e+00> : vector<16x128xf32>
    %130 = tpu.matmul %127, %129, %cst_75 {dimension_numbers = #tpu.dot_dimension_numbers<[1], [0], [0], [1], [0, 0, 1, 1], [], []>} : vector<16x128xf32>, vector<128x128xf32>, vector<16x128xf32> -> vector<16x128xf32>
    %c2_76 = arith.constant 2 : index
    %c0_77 = arith.constant 0 : index
    %c0_78 = arith.constant 0 : index
    %131 = vector.load %arg7[%c2_76, %c0_77, %c0_78] : memref<3x1x128xf32, #tpu.memory_space<vmem>>, vector<1x1x128xf32>
    %132 = vector.shape_cast %131 : vector<1x1x128xf32> to vector<1x128xf32>
    %133 = vector.broadcast %132 : vector<1x128xf32> to vector<16x128xf32>
    %134 = arith.addf %130, %133 : vector<16x128xf32>
    %135 = arith.addf %90, %134 : vector<16x128xf32>
    %c0_79 = arith.constant 0 : index
    %c0_80 = arith.constant 0 : index
    %c0_81 = arith.constant 0 : index
    %136 = vector.load %arg4[%c0_79, %c0_80, %c0_81] : memref<3x1x128xf32, #tpu.memory_space<vmem>>, vector<1x1x128xf32>
    %137 = vector.shape_cast %136 : vector<1x1x128xf32> to vector<1x128xf32>
    %138 = vector.broadcast %137 : vector<1x128xf32> to vector<16x128xf32>
    %139 = arith.mulf %135, %138 : vector<16x128xf32>
    %c0_82 = arith.constant 0 : index
    %c0_83 = arith.constant 0 : index
    %c0_84 = arith.constant 0 : index
    %140 = vector.load %arg5[%c0_82, %c0_83, %c0_84] : memref<3x1x128xf32, #tpu.memory_space<vmem>>, vector<1x1x128xf32>
    %141 = vector.shape_cast %140 : vector<1x1x128xf32> to vector<1x128xf32>
    %142 = vector.broadcast %141 : vector<1x128xf32> to vector<16x128xf32>
    %143 = arith.addf %139, %142 : vector<16x128xf32>
    %cst_85 = arith.constant 0.000000e+00 : f32
    %144 = vector.broadcast %cst_85 : f32 to vector<16x128xf32>
    %145 = arith.maximumf %143, %144 : vector<16x128xf32>
    %c0_86 = arith.constant 0 : index
    %c0_87 = arith.constant 0 : index
    %146 = vector.load %arg9[%c0_86, %c0_87] : memref<16x128xf32, #tpu.memory_space<vmem>>, vector<16x128xf32>
    tpu.vector_store %arg9[%c0_86, %c0_87], %145 {strides = array<i32>} : memref<16x128xf32, #tpu.memory_space<vmem>>, vector<16x128xf32>,
    return
  }
}

</mosaic_0001>

<llo_original>
// kernel: deepergcn_forward.1
$region0: #{deepergcn_forward.1}
  #allocation0 [shape = 'u32[]', space=smem, size = 0x4, offset = 0x4, fixed_abs, tag = 'smem constant byte address 0x4 - core index']
  #allocation1 [shape = 'u32[144,128]{1,0:T(1,128)}', space=vmem, size = 0x12000, scoped, tag = 'internal scratch']
  %s0 = inlined_call_operand.vmem [shape: f32[16,128], index: 0, kind: input, shape index: {}]
  %s1 = inlined_call_operand.vmem [shape: f32[48,128], index: 1, kind: input, shape index: {}]
  %s2 = inlined_call_operand.vmem [shape: bf16[48,16], index: 2, kind: input, shape index: {}]
  %s3 = inlined_call_operand.vmem [shape: bf16[16,48], index: 3, kind: input, shape index: {}]
  %s4 = inlined_call_operand.vmem [shape: f32[3,1,128], index: 4, kind: input, shape index: {}]
  %s5 = inlined_call_operand.vmem [shape: f32[3,1,128], index: 5, kind: input, shape index: {}]
  %s6 = inlined_call_operand.vmem [shape: f32[3,128,128], index: 6, kind: input, shape index: {}]
  %s7 = inlined_call_operand.vmem [shape: f32[3,1,128], index: 7, kind: input, shape index: {}]
  %s8 = inlined_call_operand.vmem [shape: f32[3], index: 8, kind: input, shape index: {}]
  %s9 = inlined_call_operand.hbm [shape: f32[16,128], index: 9, kind: output, shape index: {}]
  %s10 = sld [smem:[#allocation0]]
  $region50: #{deepergcn_forward.1} parent=0
    _
  %s12 = ssub.s32 1, %s10
  %s13 = scalar_select 0, %s12, %s10
  $region1: #{deepergcn_forward.1} parent=0
    #allocation2 [shape = 'u8[512]{0}', space=smem, size = 0x200, scoped, tag = 'input window, operand 8, single buffered']
    #allocation3 [shape = 's32[1]{0}', space=sflag, size = 0x4, scoped, tag = 'scoped memory for deepergcn_forward.1']
    #allocation4 [shape = 's32[1]{0}', space=sflag, size = 0x4, scoped, tag = 'scoped memory for deepergcn_forward.1']
    #allocation5 [shape = 'u8[8192]{0}', space=vmem, size = 0x2000, scoped, tag = 'output window, operand 0, single buffered']
    %14 = vsyncpa [#allocation4], 0
    %15 = vsyncpa [#allocation3], 0
    // Predicated region
    $region2: #{deepergcn_forward.1} parent=1 // pred_check
      _
    $region3: #{deepergcn_forward.1} parent=1 // pred_check_branch
      %17 = sbr.rel (0) target = $region5
    $region4: #{deepergcn_forward.1} parent=1 // pred_region
      _
    $region5: #{deepergcn_forward.1} parent=1 // pred_fallthru
      _
    // Predicated region
    $region6: #{deepergcn_forward.1} parent=1 // pred_check
      _
    $region7: #{deepergcn_forward.1} parent=1 // pred_check_branch
      %19 = sbr.rel (0) target = $region9
    $region8: #{deepergcn_forward.1} parent=1 // pred_region
      _
    $region9: #{deepergcn_forward.1} parent=1 // pred_fallthru
      _
    // Predicated region
    $region10: #{deepergcn_forward.1} parent=1 // pred_check
      _
    $region11: #{deepergcn_forward.1} parent=1 // pred_check_branch
      %21 = sbr.rel (0) target = $region13
    $region12: #{deepergcn_forward.1} parent=1 // pred_region
      _
    $region13: #{deepergcn_forward.1} parent=1 // pred_fallthru
      _
    // Predicated region
    $region14: #{deepergcn_forward.1} parent=1 // pred_check
      _
    $region15: #{deepergcn_forward.1} parent=1 // pred_check_branch
      %23 = sbr.rel (0) target = $region17
    $region16: #{deepergcn_forward.1} parent=1 // pred_region
      _
    $region17: #{deepergcn_forward.1} parent=1 // pred_fallthru
      _
    // Predicated region
    $region18: #{deepergcn_forward.1} parent=1 // pred_check
      _
    $region19: #{deepergcn_forward.1} parent=1 // pred_check_branch
      %25 = sbr.rel (0) target = $region21
    $region20: #{deepergcn_forward.1} parent=1 // pred_region
      _
    $region21: #{deepergcn_forward.1} parent=1 // pred_fallthru
      _
    // Predicated region
    $region22: #{deepergcn_forward.1} parent=1 // pred_check
      _
    $region23: #{deepergcn_forward.1} parent=1 // pred_check_branch
      %27 = sbr.rel (0) target = $region25
    $region24: #{deepergcn_forward.1} parent=1 // pred_region
      _
    $region25: #{deepergcn_forward.1} parent=1 // pred_fallthru
      _
    // Predicated region
    $region26: #{deepergcn_forward.1} parent=1 // pred_check
      _
    $region27: #{deepergcn_forward.1} parent=1 // pred_check_branch
      %29 = sbr.rel (0) target = $region29
    $region28: #{deepergcn_forward.1} parent=1 // pred_region
      _
    $region29: #{deepergcn_forward.1} parent=1 // pred_fallthru
      _
    // Predicated region
    $region30: #{deepergcn_forward.1} parent=1 // pred_check
      _
    $region31: #{deepergcn_forward.1} parent=1 // pred_check_branch
      %31 = sbr.rel (0) target = $region33
    $region32: #{deepergcn_forward.1} parent=1 // pred_region
      _
    $region33: #{deepergcn_forward.1} parent=1 // pred_fallthru
      _
    // Predicated region
    $region34: #{deepergcn_forward.1} parent=1 // pred_check
      _
    $region35: #{deepergcn_forward.1} parent=1 // pred_check_branch
      %33 = sbr.rel (0) target = $region37
    $region36: #{deepergcn_forward.1} parent=1 // pred_region
      %s35 = ssub.s32 16, 16
      %36 = vsyncadd [#allocation4], %s35
      %s38 = sshll.u32 %s8, 4
      %s39 = int_to_ptr.vmem [resolvable:$true] %s38
      %41 = dma.vmem_to_smem %s39, 16, [#allocation2], [#allocation4]
    $region37: #{deepergcn_forward.1} parent=1 // pred_fallthru
      _
    // Predicated region
    $region38: #{deepergcn_forward.1} parent=1 // pred_check
      _
    $region39: #{deepergcn_forward.1} parent=1 // pred_check_branch
      %43 = sbr.rel (0) target = $region41
    $region40: #{deepergcn_forward.1} parent=1 // pred_region
      %44 = dma.done [#allocation4], 16
    $region41: #{deepergcn_forward.1} parent=1 // pred_fallthru
      _
    %45 = sfence
    %v47 = vld [vmem:[%s0] sm:$0xff]
    %v48 = vld [vmem:[%s0 + $0x8] sm:$0xff]
    %v49 = vld [vmem:[%s4] sm:$0x1]
    %v51 = vlaneseq
    %v52 = vshrl.u32 %v51, 7
    %v53 = vsub.s32 0, %v52
    %v54 = vrot.slane %v49, %v53
    %v56 = vmul.f32 %v47, %v54
    %v57 = vmul.f32 %v48, %v54
    %v58 = vld [vmem:[%s5] sm:$0x1]
    %v60 = vlaneseq
    %v61 = vshrl.u32 %v60, 7
    %v62 = vsub.s32 0, %v61
    %v63 = vrot.slane %v58, %v62
    %v65 = vadd.f32 %v56, %v63
    %v66 = vadd.f32 %v57, %v63
    %v67 = vmax.f32 %v65, 0.0
    %v68 = vmax.f32 %v66, 0.0
    %v69 = vld [vmem:[%s2] sm:$0xf]
    %v70 = vld [vmem:[%s2 + $0x4] sm:$0xf]
    %v71 = vld [vmem:[%s2 + $0x8] sm:$0xf]
    %v72 = vld [vmem:[%s2 + $0xc] sm:$0xf]
    %v73 = vld [vmem:[%s2 + $0x10] sm:$0xf]
    %v74 = vld [vmem:[%s2 + $0x14] sm:$0xf]
    %v75 = vpack.c.bf16 %v68, %v67
    %v76 = vld [vmem:[%s1] sm:$0xff]
    %v77 = vld [vmem:[%s1 + $0x8] sm:$0xff]
    %v78 = vld [vmem:[%s1 + $0x10] sm:$0xff]
    %v79 = vld [vmem:[%s1 + $0x18] sm:$0xff]
    %v80 = vld [vmem:[%s1 + $0x20] sm:$0xff]
    %v81 = vld [vmem:[%s1 + $0x28] sm:$0xff]
    %v88 = vunpack.c.l.b16 %v69
    %v89 = vunpack.c.l.b16 %v70
    %v90 = vunpack.c.l.b16 %v71
    %v91 = vunpack.c.l.b16 %v72
    %v92 = vunpack.c.l.b16 %v73
    %v93 = vunpack.c.l.b16 %v74
    %v94 = vpack.c.b16 %v89, %v88
    %v95 = vpack.c.b16 %v91, %v90
    %v96 = vpack.c.b16 %v93, %v92
    %vm97 = vcmask 130048
    %v99 = vsel %vm97, %v94, 0
    %v102 = vsel %vm97, %v95, 0
    %v105 = vsel %vm97, %v96, 0
    %107 = vmatprep.subr.bf16.mxu0 0
    %108 = vmatpush1.bf16.msra.mxu0 0
    %109 = vmatprep.subr.bf16.mxu0 0
    %110 = vmatpush1.bf16.msra.mxu0 0
    %111 = vmatprep.subr.bf16.mxu0 0
    %112 = vmatpush1.bf16.msra.mxu0 0
    %113 = vmatprep.subr.bf16.mxu0 0
    %114 = vmatpush1.bf16.msra.mxu0 0
    %115 = vmatprep.subr.bf16.mxu0 0
    %116 = vmatpush1.bf16.msra.mxu0 0
    %117 = vmatprep.subr.bf16.mxu0 0
    %118 = vmatpush1.bf16.msra.mxu0 0
    %119 = vmatprep.subr.bf16.mxu0 0
    %120 = vmatpush1.bf16.msra.mxu0 0
    %121 = vmatprep.subr.bf16.mxu0 0
    %122 = vmatpush1.bf16.msra.mxu0 %v75
    %123 = vmatprep.subr.bf16.mxu0 0
    %124 = vmatpush2.bf16.msra.mxu0 0
    %125 = vmatprep.subr.bf16.mxu0 0
    %126 = vmatpush2.bf16.msra.mxu0 0
    %127 = vmatprep.subr.bf16.mxu0 0
    %128 = vmatpush2.bf16.msra.mxu0 0
    %129 = vmatprep.subr.bf16.mxu0 0
    %130 = vmatpush2.bf16.msra.mxu0 0
    %131 = vmatprep.subr.bf16.mxu0 0
    %132 = vmatpush2.bf16.msra.mxu0 0
    %133 = vmatprep.subr.bf16.mxu0 0
    %134 = vmatpush2.bf16.msra.mxu0 0
    %135 = vmatprep.subr.bf16.mxu0 0
    %136 = vmatpush2.bf16.msra.mxu0 0
    %137 = vmatprep.subr.bf16.mxu0 0
    %138 = vmatpush2.bf16.msra.mxu0 0
    %139 = vmatprep.mubr.bf16.mxu0 0
    %140 = vmatmul.mubr.bf16.gmra.mxu0 %v99
    %v141 = vpop.f32.mrf.mxu0
    %v142 = vadd.f32 %v76, %v141
    %v143 = vpop.f32.mrf.mxu0
    %v144 = vpop.f32.mrf.mxu0
    %v145 = vadd.f32 %v77, %v144
    %v146 = vpop.f32.mrf.mxu0
    %147 = vmatprep.mubr.bf16.mxu0 0
    %148 = vmatmul.mubr.bf16.gmra.mxu0 %v102
    %v149 = vpop.f32.mrf.mxu0
    %v150 = vadd.f32 %v78, %v149
    %v151 = vpop.f32.mrf.mxu0
    %v152 = vpop.f32.mrf.mxu0
    %v153 = vadd.f32 %v79, %v152
    %v154 = vpop.f32.mrf.mxu0
    %155 = vmatprep.mubr.bf16.mxu0 0
    %156 = vmatmul.mubr.bf16.gmra.mxu0 %v105
    %v157 = vpop.f32.mrf.mxu0
    %v158 = vadd.f32 %v80, %v157
    %v159 = vpop.f32.mrf.mxu0
    %v160 = vpop.f32.mrf.mxu0
    %v161 = vadd.f32 %v81, %v160
    %v162 = vpop.f32.mrf.mxu0
    %163 = vdwg.mxu0
    %v164 = vmax.f32 %v142, 0.0
    %v165 = vmax.f32 %v145, 0.0
    %v166 = vmax.f32 %v150, 0.0
    %v167 = vmax.f32 %v153, 0.0
    %v168 = vmax.f32 %v158, 0.0
    %v169 = vmax.f32 %v161, 0.0
    %v170 = vadd.f32 %v164, 1e-07
    %v171 = vadd.f32 %v165, 1e-07
    %v172 = vadd.f32 %v166, 1e-07
    %v173 = vadd.f32 %v167, 1e-07
    %v174 = vadd.f32 %v168, 1e-07
    %v175 = vadd.f32 %v169, 1e-07
    %s176 = sld [smem:[#allocation2]]
    %v177 = vstv %s176
    %v178 = vmul.f32 %v177, %v170
    %v179 = vmul.f32 %v177, %v171
    %v180 = vmul.f32 %v177, %v172
    %v181 = vmul.f32 %v177, %v173
    %v182 = vmul.f32 %v177, %v174
    %v183 = vmul.f32 %v177, %v175
    %v184 = vmin.f32 %v178, 80.0
    %v185 = vmin.f32 %v179, 80.0
    %v186 = vmin.f32 %v180, 80.0
    %v187 = vmin.f32 %v181, 80.0
    %v188 = vmin.f32 %v182, 80.0
    %v189 = vmin.f32 %v183, 80.0
    %v190 = vmul.f32 %v184, 1.442695
    %v191 = vpow.pop %v190
    %v192 = vmul.f32 %v185, 1.442695
    %v193 = vpow.pop %v192
    %v194 = vmul.f32 %v186, 1.442695
    %v195 = vpow.pop %v194
    %v196 = vmul.f32 %v187, 1.442695
    %v197 = vpow.pop %v196
    %v198 = vmul.f32 %v188, 1.442695
    %v199 = vpow.pop %v198
    %v200 = vmul.f32 %v189, 1.442695
    %v201 = vpow.pop %v200
    %v202 = vpack.c.bf16 %v193, %v191
    %v203 = vpack.c.bf16 %v197, %v195
    %v204 = vpack.c.bf16 %v201, %v199
    %v205 = vmul.f32 %v191, %v170
    %v206 = vmul.f32 %v193, %v171
    %v207 = vmul.f32 %v195, %v172
    %v208 = vmul.f32 %v197, %v173
    %v209 = vmul.f32 %v199, %v174
    %v210 = vmul.f32 %v201, %v175
    %v211 = vpack.c.bf16 %v206, %v205
    %v212 = vpack.c.bf16 %v208, %v207
    %v213 = vpack.c.bf16 %v210, %v209
    %v214 = vld [vmem:[%s3] sm:$0xf]
    %v215 = vld [vmem:[%s3 + $0x4] sm:$0xf]
    %v218 = vunpack.c.l.b16 %v214
    %v219 = vunpack.c.l.b16 %v215
    %v220 = vpack.c.b16 %v219, %v218
    %vm221 = vcmask 392192
    %v223 = vsel %vm221, %v220, 0
    %225 = vmatprep.subr.bf16.mxu0 0
    %226 = vmatpush1.bf16.msra.mxu0 0
    %227 = vmatprep.subr.bf16.mxu0 0
    %228 = vmatpush1.bf16.msra.mxu0 0
    %229 = vmatprep.subr.bf16.mxu0 0
    %230 = vmatpush1.bf16.msra.mxu0 0
    %231 = vmatprep.subr.bf16.mxu0 0
    %232 = vmatpush1.bf16.msra.mxu0 0
    %233 = vmatprep.subr.bf16.mxu0 0
    %234 = vmatpush1.bf16.msra.mxu0 0
    %235 = vmatprep.subr.bf16.mxu0 %v213
    %236 = vmatpush1.bf16.msra.mxu0 %v204
    %237 = vmatprep.subr.bf16.mxu0 %v212
    %238 = vmatpush1.bf16.msra.mxu0 %v203
    %239 = vmatprep.subr.bf16.mxu0 %v211
    %240 = vmatpush1.bf16.msra.mxu0 %v202
    %241 = vmatprep.subr.bf16.mxu0 0
    %242 = vmatpush2.bf16.msra.mxu0 0
    %243 = vmatprep.subr.bf16.mxu0 0
    %244 = vmatpush2.bf16.msra.mxu0 0
    %245 = vmatprep.subr.bf16.mxu0 0
    %246 = vmatpush2.bf16.msra.mxu0 0
    %247 = vmatprep.subr.bf16.mxu0 0
    %248 = vmatpush2.bf16.msra.mxu0 0
    %249 = vmatprep.subr.bf16.mxu0 0
    %250 = vmatpush2.bf16.msra.mxu0 0
    %251 = vmatprep.subr.bf16.mxu0 0
    %252 = vmatpush2.bf16.msra.mxu0 0
    %253 = vmatprep.subr.bf16.mxu0 0
    %254 = vmatpush2.bf16.msra.mxu0 0
    %255 = vmatprep.subr.bf16.mxu0 0
    %256 = vmatpush2.bf16.msra.mxu0 0
    %257 = vmatprep.mubr.bf16.mxu0 0
    %258 = vmatmul.mubr.bf16.gmra.mxu0 %v223
    %v259 = vpop.f32.mrf.mxu0
    %v260 = vadd.f32 0.0, %v259
    %v261 = vpop.f32.mrf.mxu0
    %v262 = vadd.f32 0.0, %v261
    %v263 = vpop.f32.mrf.mxu0
    %v264 = vadd.f32 0.0, %v263
    %v265 = vpop.f32.mrf.mxu0
    %v266 = vadd.f32 0.0, %v265
    %267 = vdwg.mxu0
    %v268 = vmax.f32 %v260, 1e-16
    %v269 = vmax.f32 %v264, 1e-16
    %v270 = vrcp.pop %v268
    %v271 = vmul.f32 %v262, %v270
    %v272 = vrcp.pop %v269
    %v273 = vmul.f32 %v266, %v272
    %v274 = vadd.f32 %v271, %v67
    %v275 = vadd.f32 %v273, %v68
    %v276 = vld [vmem:[%s6] sm:$0xff]
    %v277 = vld [vmem:[%s6 + $0x8] sm:$0xff]
    %v278 = vld [vmem:[%s6 + $0x10] sm:$0xff]
    %v279 = vld [vmem:[%s6 + $0x18] sm:$0xff]
    %v280 = vld [vmem:[%s6 + $0x20] sm:$0xff]
    %v281 = vld [vmem:[%s6 + $0x28] sm:$0xff]
    %v282 = vld [vmem:[%s6 + $0x30] sm:$0xff]
    %v283 = vld [vmem:[%s6 + $0x38] sm:$0xff]
    %v284 = vld [vmem:[%s6 + $0x40] sm:$0xff]
    %v285 = vld [vmem:[%s6 + $0x48] sm:$0xff]
    %v286 = vld [vmem:[%s6 + $0x50] sm:$0xff]
    %v287 = vld [vmem:[%s6 + $0x58] sm:$0xff]
    %v288 = vld [vmem:[%s6 + $0x60] sm:$0xff]
    %v289 = vld [vmem:[%s6 + $0x68] sm:$0xff]
    %v290 = vld [vmem:[%s6 + $0x70] sm:$0xff]
    %v291 = vld [vmem:[%s6 + $0x78] sm:$0xff]
    %v292 = vld [vmem:[%s7] sm:$0x1]
    %v294 = vlaneseq
    %v295 = vshrl.u32 %v294, 7
    %v296 = vsub.s32 0, %v295
    %v297 = vrot.slane %v292, %v296
    %299 = vmatprep.subr.mxu0 0.0
    %300 = vmatpush1.msra.mxu0 %v291
    %301 = vmatprep.subr.mxu0 0.0
    %302 = vmatpush1.msra.mxu0 %v290
    %303 = vmatprep.subr.mxu0 0.0
    %304 = vmatpush1.msra.mxu0 %v289
    %305 = vmatprep.subr.mxu0 0.0
    %306 = vmatpush1.msra.mxu0 %v288
    %307 = vmatprep.subr.mxu0 0.0
    %308 = vmatpush1.msra.mxu0 %v287
    %309 = vmatprep.subr.mxu0 0.0
    %310 = vmatpush1.msra.mxu0 %v286
    %311 = vmatprep.subr.mxu0 0.0
    %312 = vmatpush1.msra.mxu0 %v285
    %313 = vmatprep.subr.mxu0 0.0
    %314 = vmatpush1.msra.mxu0 %v284
    %315 = vmatprep.subr.mxu0 0.0
    %316 = vmatpush1.msra.mxu0 %v283
    %317 = vmatprep.subr.mxu0 0.0
    %318 = vmatpush1.msra.mxu0 %v282
    %319 = vmatprep.subr.mxu0 0.0
    %320 = vmatpush1.msra.mxu0 %v281
    %321 = vmatprep.subr.mxu0 0.0
    %322 = vmatpush1.msra.mxu0 %v280
    %323 = vmatprep.subr.mxu0 0.0
    %324 = vmatpush1.msra.mxu0 %v279
    %325 = vmatprep.subr.mxu0 0.0
    %326 = vmatpush1.msra.mxu0 %v278
    %327 = vmatprep.subr.mxu0 0.0
    %328 = vmatpush1.msra.mxu0 %v277
    %329 = vmatprep.subr.mxu0 0.0
    %330 = vmatpush1.msra.mxu0 %v276
    %331 = vmatprep.subr.mxu0 0.0
    %332 = vmatpush2.msra.mxu0 0.0
    %333 = vmatprep.subr.mxu0 0.0
    %334 = vmatpush2.msra.mxu0 0.0
    %335 = vmatprep.subr.mxu0 0.0
    %336 = vmatpush2.msra.mxu0 0.0
    %337 = vmatprep.subr.mxu0 0.0
    %338 = vmatpush2.msra.mxu0 0.0
    %339 = vmatprep.subr.mxu0 0.0
    %340 = vmatpush2.msra.mxu0 0.0
    %341 = vmatprep.subr.mxu0 0.0
    %342 = vmatpush2.msra.mxu0 0.0
    %343 = vmatprep.subr.mxu0 0.0
    %344 = vmatpush2.msra.mxu0 0.0
    %345 = vmatprep.subr.mxu0 0.0
    %346 = vmatpush2.msra.mxu0 0.0
    %347 = vmatprep.subr.mxu0 0.0
    %348 = vmatpush2.msra.mxu0 0.0
    %349 = vmatprep.subr.mxu0 0.0
    %350 = vmatpush2.msra.mxu0 0.0
    %351 = vmatprep.subr.mxu0 0.0
    %352 = vmatpush2.msra.mxu0 0.0
    %353 = vmatprep.subr.mxu0 0.0
    %354 = vmatpush2.msra.mxu0 0.0
    %355 = vmatprep.subr.mxu0 0.0
    %356 = vmatpush2.msra.mxu0 0.0
    %357 = vmatprep.subr.mxu0 0.0
    %358 = vmatpush2.msra.mxu0 0.0
    %359 = vmatprep.subr.mxu0 0.0
    %360 = vmatpush2.msra.mxu0 0.0
    %361 = vmatprep.subr.mxu0 0.0
    %362 = vmatpush2.msra.mxu0 0.0
    %363 = vmatprep.mubr.f32.mxu0 0.0
    %364 = vmatmul.mubr.f32.gmra.mxu0 %v274
    %v365 = vpop.f32.mrf.mxu0
    %v366 = vadd.f32 %v297, %v365
    %v367 = vpop.f32.mrf.mxu0
    %368 = vmatprep.mubr.f32.mxu0 0.0
    %369 = vmatmul.mubr.f32.gmra.mxu0 %v275
    %v370 = vpop.f32.mrf.mxu0
    %v371 = vadd.f32 %v297, %v370
    %v372 = vpop.f32.mrf.mxu0
    %373 = vdwg.mxu0
    %v374 = vadd.f32 %v47, %v366
    %v375 = vadd.f32 %v48, %v371
    %s376 = scalar_lea.vmem %s4, 1
    %v377 = vld [vmem:[%s376] sm:$0x1]
    %v379 = vlaneseq
    %v380 = vshrl.u32 %v379, 7
    %v381 = vsub.s32 0, %v380
    %v382 = vrot.slane %v377, %v381
    %v384 = vmul.f32 %v374, %v382
    %v385 = vmul.f32 %v375, %v382
    %s386 = scalar_lea.vmem %s5, 1
    %v387 = vld [vmem:[%s386] sm:$0x1]
    %v389 = vlaneseq
    %v390 = vshrl.u32 %v389, 7
    %v391 = vsub.s32 0, %v390
    %v392 = vrot.slane %v387, %v391
    %v394 = vadd.f32 %v384, %v392
    %v395 = vadd.f32 %v385, %v392
    %v396 = vmax.f32 %v394, 0.0
    %v397 = vmax.f32 %v395, 0.0
    %v398 = vpack.c.bf16 %v397, %v396
    %399 = vmatprep.subr.bf16.mxu0 0
    %400 = vmatpush1.bf16.msra.mxu0 0
    %401 = vmatprep.subr.bf16.mxu0 0
    %402 = vmatpush1.bf16.msra.mxu0 0
    %403 = vmatprep.subr.bf16.mxu0 0
    %404 = vmatpush1.bf16.msra.mxu0 0
    %405 = vmatprep.subr.bf16.mxu0 0
    %406 = vmatpush1.bf16.msra.mxu0 0
    %407 = vmatprep.subr.bf16.mxu0 0
    %408 = vmatpush1.bf16.msra.mxu0 0
    %409 = vmatprep.subr.bf16.mxu0 0
    %410 = vmatpush1.bf16.msra.mxu0 0
    %411 = vmatprep.subr.bf16.mxu0 0
    %412 = vmatpush1.bf16.msra.mxu0 0
    %413 = vmatprep.subr.bf16.mxu0 0
    %414 = vmatpush1.bf16.msra.mxu0 %v398
    %415 = vmatprep.subr.bf16.mxu0 0
    %416 = vmatpush2.bf16.msra.mxu0 0
    %417 = vmatprep.subr.bf16.mxu0 0
    %418 = vmatpush2.bf16.msra.mxu0 0
    %419 = vmatprep.subr.bf16.mxu0 0
    %420 = vmatpush2.bf16.msra.mxu0 0
    %421 = vmatprep.subr.bf16.mxu0 0
    %422 = vmatpush2.bf16.msra.mxu0 0
    %423 = vmatprep.subr.bf16.mxu0 0
    %424 = vmatpush2.bf16.msra.mxu0 0
    %425 = vmatprep.subr.bf16.mxu0 0
    %426 = vmatpush2.bf16.msra.mxu0 0
    %427 = vmatprep.subr.bf16.mxu0 0
    %428 = vmatpush2.bf16.msra.mxu0 0
    %429 = vmatprep.subr.bf16.mxu0 0
    %430 = vmatpush2.bf16.msra.mxu0 0
    %431 = vmatprep.mubr.bf16.mxu0 0
    %432 = vmatmul.mubr.bf16.gmra.mxu0 %v99
    %v433 = vpop.f32.mrf.mxu0
    %v434 = vadd.f32 %v76, %v433
    %v435 = vpop.f32.mrf.mxu0
    %v436 = vpop.f32.mrf.mxu0
    %v437 = vadd.f32 %v77, %v436
    %v438 = vpop.f32.mrf.mxu0
    %439 = vmatprep.mubr.bf16.mxu0 0
    %440 = vmatmul.mubr.bf16.gmra.mxu0 %v102
    %v441 = vpop.f32.mrf.mxu0
    %v442 = vadd.f32 %v78, %v441
    %v443 = vpop.f32.mrf.mxu0
    %v444 = vpop.f32.mrf.mxu0
    %v445 = vadd.f32 %v79, %v444
    %v446 = vpop.f32.mrf.mxu0
    %447 = vmatprep.mubr.bf16.mxu0 0
    %448 = vmatmul.mubr.bf16.gmra.mxu0 %v105
    %v449 = vpop.f32.mrf.mxu0
    %v450 = vadd.f32 %v80, %v449
    %v451 = vpop.f32.mrf.mxu0
    %v452 = vpop.f32.mrf.mxu0
    %v453 = vadd.f32 %v81, %v452
    %v454 = vpop.f32.mrf.mxu0
    %455 = vdwg.mxu0
    %v456 = vmax.f32 %v434, 0.0
    %v457 = vmax.f32 %v437, 0.0
    %v458 = vmax.f32 %v442, 0.0
    %v459 = vmax.f32 %v445, 0.0
    %v460 = vmax.f32 %v450, 0.0
    %v461 = vmax.f32 %v453, 0.0
    %v462 = vadd.f32 %v456, 1e-07
    %v463 = vadd.f32 %v457, 1e-07
    %v464 = vadd.f32 %v458, 1e-07
    %v465 = vadd.f32 %v459, 1e-07
    %v466 = vadd.f32 %v460, 1e-07
    %v467 = vadd.f32 %v461, 1e-07
    %s468 = sld [smem:[#allocation2 + $0x1]]
    %v469 = vstv %s468
    %v470 = vmul.f32 %v469, %v462
    %v471 = vmul.f32 %v469, %v463
    %v472 = vmul.f32 %v469, %v464
    %v473 = vmul.f32 %v469, %v465
    %v474 = vmul.f32 %v469, %v466
    %v475 = vmul.f32 %v469, %v467
    %v476 = vmin.f32 %v470, 80.0
    %v477 = vmin.f32 %v471, 80.0
    %v478 = vmin.f32 %v472, 80.0
    %v479 = vmin.f32 %v473, 80.0
    %v480 = vmin.f32 %v474, 80.0
    %v481 = vmin.f32 %v475, 80.0
    %v482 = vmul.f32 %v476, 1.442695
    %v483 = vpow.pop %v482
    %v484 = vmul.f32 %v477, 1.442695
    %v485 = vpow.pop %v484
    %v486 = vmul.f32 %v478, 1.442695
    %v487 = vpow.pop %v486
    %v488 = vmul.f32 %v479, 1.442695
    %v489 = vpow.pop %v488
    %v490 = vmul.f32 %v480, 1.442695
    %v491 = vpow.pop %v490
    %v492 = vmul.f32 %v481, 1.442695
    %v493 = vpow.pop %v492
    %v494 = vpack.c.bf16 %v485, %v483
    %v495 = vpack.c.bf16 %v489, %v487
    %v496 = vpack.c.bf16 %v493, %v491
    %v497 = vmul.f32 %v483, %v462
    %v498 = vmul.f32 %v485, %v463
    %v499 = vmul.f32 %v487, %v464
    %v500 = vmul.f32 %v489, %v465
    %v501 = vmul.f32 %v491, %v466
    %v502 = vmul.f32 %v493, %v467
    %v503 = vpack.c.bf16 %v498, %v497
    %v504 = vpack.c.bf16 %v500, %v499
    %v505 = vpack.c.bf16 %v502, %v501
    %506 = vmatprep.subr.bf16.mxu0 0
    %507 = vmatpush1.bf16.msra.mxu0 0
    %508 = vmatprep.subr.bf16.mxu0 0
    %509 = vmatpush1.bf16.msra.mxu0 0
    %510 = vmatprep.subr.bf16.mxu0 0
    %511 = vmatpush1.bf16.msra.mxu0 0
    %512 = vmatprep.subr.bf16.mxu0 0
    %513 = vmatpush1.bf16.msra.mxu0 0
    %514 = vmatprep.subr.bf16.mxu0 0
    %515 = vmatpush1.bf16.msra.mxu0 0
    %516 = vmatprep.subr.bf16.mxu0 %v505
    %517 = vmatpush1.bf16.msra.mxu0 %v496
    %518 = vmatprep.subr.bf16.mxu0 %v504
    %519 = vmatpush1.bf16.msra.mxu0 %v495
    %520 = vmatprep.subr.bf16.mxu0 %v503
    %521 = vmatpush1.bf16.msra.mxu0 %v494
    %522 = vmatprep.subr.bf16.mxu0 0
    %523 = vmatpush2.bf16.msra.mxu0 0
    %524 = vmatprep.subr.bf16.mxu0 0
    %525 = vmatpush2.bf16.msra.mxu0 0
    %526 = vmatprep.subr.bf16.mxu0 0
    %527 = vmatpush2.bf16.msra.mxu0 0
    %528 = vmatprep.subr.bf16.mxu0 0
    %529 = vmatpush2.bf16.msra.mxu0 0
    %530 = vmatprep.subr.bf16.mxu0 0
    %531 = vmatpush2.bf16.msra.mxu0 0
    %532 = vmatprep.subr.bf16.mxu0 0
    %533 = vmatpush2.bf16.msra.mxu0 0
    %534 = vmatprep.subr.bf16.mxu0 0
    %535 = vmatpush2.bf16.msra.mxu0 0
    %536 = vmatprep.subr.bf16.mxu0 0
    %537 = vmatpush2.bf16.msra.mxu0 0
    %538 = vmatprep.mubr.bf16.mxu0 0
    %539 = vmatmul.mubr.bf16.gmra.mxu0 %v223
    %v540 = vpop.f32.mrf.mxu0
    %v541 = vadd.f32 0.0, %v540
    %v542 = vpop.f32.mrf.mxu0
    %v543 = vadd.f32 0.0, %v542
    %v544 = vpop.f32.mrf.mxu0
    %v545 = vadd.f32 0.0, %v544
    %v546 = vpop.f32.mrf.mxu0
    %v547 = vadd.f32 0.0, %v546
    %548 = vdwg.mxu0
    %v549 = vmax.f32 %v541, 1e-16
    %v550 = vmax.f32 %v545, 1e-16
    %v551 = vrcp.pop %v549
    %v552 = vmul.f32 %v543, %v551
    %v553 = vrcp.pop %v550
    %v554 = vmul.f32 %v547, %v553
    %v555 = vadd.f32 %v552, %v396
    %v556 = vadd.f32 %v554, %v397
    %s557 = scalar_lea.vmem %s6, 128
    %v558 = vld [vmem:[%s557] sm:$0xff]
    %v559 = vld [vmem:[%s557 + $0x8] sm:$0xff]
    %v560 = vld [vmem:[%s557 + $0x10] sm:$0xff]
    %v561 = vld [vmem:[%s557 + $0x18] sm:$0xff]
    %v562 = vld [vmem:[%s557 + $0x20] sm:$0xff]
    %v563 = vld [vmem:[%s557 + $0x28] sm:$0xff]
    %v564 = vld [vmem:[%s557 + $0x30] sm:$0xff]
    %v565 = vld [vmem:[%s557 + $0x38] sm:$0xff]
    %v566 = vld [vmem:[%s557 + $0x40] sm:$0xff]
    %v567 = vld [vmem:[%s557 + $0x48] sm:$0xff]
    %v568 = vld [vmem:[%s557 + $0x50] sm:$0xff]
    %v569 = vld [vmem:[%s557 + $0x58] sm:$0xff]
    %v570 = vld [vmem:[%s557 + $0x60] sm:$0xff]
    %v571 = vld [vmem:[%s557 + $0x68] sm:$0xff]
    %v572 = vld [vmem:[%s557 + $0x70] sm:$0xff]
    %v573 = vld [vmem:[%s557 + $0x78] sm:$0xff]
    %s574 = scalar_lea.vmem %s7, 1
    %v575 = vld [vmem:[%s574] sm:$0x1]
    %v577 = vlaneseq
    %v578 = vshrl.u32 %v577, 7
    %v579 = vsub.s32 0, %v578
    %v580 = vrot.slane %v575, %v579
    %582 = vmatprep.subr.mxu0 0.0
    %583 = vmatpush1.msra.mxu0 %v573
    %584 = vmatprep.subr.mxu0 0.0
    %585 = vmatpush1.msra.mxu0 %v572
    %586 = vmatprep.subr.mxu0 0.0
    %587 = vmatpush1.msra.mxu0 %v571
    %588 = vmatprep.subr.mxu0 0.0
    %589 = vmatpush1.msra.mxu0 %v570
    %590 = vmatprep.subr.mxu0 0.0
    %591 = vmatpush1.msra.mxu0 %v569
    %592 = vmatprep.subr.mxu0 0.0
    %593 = vmatpush1.msra.mxu0 %v568
    %594 = vmatprep.subr.mxu0 0.0
    %595 = vmatpush1.msra.mxu0 %v567
    %596 = vmatprep.subr.mxu0 0.0
    %597 = vmatpush1.msra.mxu0 %v566
    %598 = vmatprep.subr.mxu0 0.0
    %599 = vmatpush1.msra.mxu0 %v565
    %600 = vmatprep.subr.mxu0 0.0
    %601 = vmatpush1.msra.mxu0 %v564
    %602 = vmatprep.subr.mxu0 0.0
    %603 = vmatpush1.msra.mxu0 %v563
    %604 = vmatprep.subr.mxu0 0.0
    %605 = vmatpush1.msra.mxu0 %v562
    %606 = vmatprep.subr.mxu0 0.0
    %607 = vmatpush1.msra.mxu0 %v561
    %608 = vmatprep.subr.mxu0 0.0
    %609 = vmatpush1.msra.mxu0 %v560
    %610 = vmatprep.subr.mxu0 0.0
    %611 = vmatpush1.msra.mxu0 %v559
    %612 = vmatprep.subr.mxu0 0.0
    %613 = vmatpush1.msra.mxu0 %v558
    %614 = vmatprep.subr.mxu0 0.0
    %615 = vmatpush2.msra.mxu0 0.0
    %616 = vmatprep.subr.mxu0 0.0
    %617 = vmatpush2.msra.mxu0 0.0
    %618 = vmatprep.subr.mxu0 0.0
    %619 = vmatpush2.msra.mxu0 0.0
    %620 = vmatprep.subr.mxu0 0.0
    %621 = vmatpush2.msra.mxu0 0.0
    %622 = vmatprep.subr.mxu0 0.0
    %623 = vmatpush2.msra.mxu0 0.0
    %624 = vmatprep.subr.mxu0 0.0
    %625 = vmatpush2.msra.mxu0 0.0
    %626 = vmatprep.subr.mxu0 0.0
    %627 = vmatpush2.msra.mxu0 0.0
    %628 = vmatprep.subr.mxu0 0.0
    %629 = vmatpush2.msra.mxu0 0.0
    %630 = vmatprep.subr.mxu0 0.0
    %631 = vmatpush2.msra.mxu0 0.0
    %632 = vmatprep.subr.mxu0 0.0
    %633 = vmatpush2.msra.mxu0 0.0
    %634 = vmatprep.subr.mxu0 0.0
    %635 = vmatpush2.msra.mxu0 0.0
    %636 = vmatprep.subr.mxu0 0.0
    %637 = vmatpush2.msra.mxu0 0.0
    %638 = vmatprep.subr.mxu0 0.0
    %639 = vmatpush2.msra.mxu0 0.0
    %640 = vmatprep.subr.mxu0 0.0
    %641 = vmatpush2.msra.mxu0 0.0
    %642 = vmatprep.subr.mxu0 0.0
    %643 = vmatpush2.msra.mxu0 0.0
    %644 = vmatprep.subr.mxu0 0.0
    %645 = vmatpush2.msra.mxu0 0.0
    %646 = vmatprep.mubr.f32.mxu0 0.0
    %647 = vmatmul.mubr.f32.gmra.mxu0 %v555
    %v648 = vpop.f32.mrf.mxu0
    %v649 = vadd.f32 %v580, %v648
    %v650 = vpop.f32.mrf.mxu0
    %651 = vmatprep.mubr.f32.mxu0 0.0
    %652 = vmatmul.mubr.f32.gmra.mxu0 %v556
    %v653 = vpop.f32.mrf.mxu0
    %v654 = vadd.f32 %v580, %v653
    %v655 = vpop.f32.mrf.mxu0
    %656 = vdwg.mxu0
    %v657 = vadd.f32 %v374, %v649
    %v658 = vadd.f32 %v375, %v654
    %s659 = scalar_lea.vmem %s4, 2
    %v660 = vld [vmem:[%s659] sm:$0x1]
    %v662 = vlaneseq
    %v663 = vshrl.u32 %v662, 7
    %v664 = vsub.s32 0, %v663
    %v665 = vrot.slane %v660, %v664
    %v667 = vmul.f32 %v657, %v665
    %v668 = vmul.f32 %v658, %v665
    %s669 = scalar_lea.vmem %s5, 2
    %v670 = vld [vmem:[%s669] sm:$0x1]
    %v672 = vlaneseq
    %v673 = vshrl.u32 %v672, 7
    %v674 = vsub.s32 0, %v673
    %v675 = vrot.slane %v670, %v674
    %v677 = vadd.f32 %v667, %v675
    %v678 = vadd.f32 %v668, %v675
    %v679 = vmax.f32 %v677, 0.0
    %v680 = vmax.f32 %v678, 0.0
    %v681 = vpack.c.bf16 %v680, %v679
    %682 = vmatprep.subr.bf16.mxu0 0
    %683 = vmatpush1.bf16.msra.mxu0 0
    %684 = vmatprep.subr.bf16.mxu0 0
    %685 = vmatpush1.bf16.msra.mxu0 0
    %686 = vmatprep.subr.bf16.mxu0 0
    %687 = vmatpush1.bf16.msra.mxu0 0
    %688 = vmatprep.subr.bf16.mxu0 0
    %689 = vmatpush1.bf16.msra.mxu0 0
    %690 = vmatprep.subr.bf16.mxu0 0
    %691 = vmatpush1.bf16.msra.mxu0 0
    %692 = vmatprep.subr.bf16.mxu0 0
    %693 = vmatpush1.bf16.msra.mxu0 0
    %694 = vmatprep.subr.bf16.mxu0 0
    %695 = vmatpush1.bf16.msra.mxu0 0
    %696 = vmatprep.subr.bf16.mxu0 0
    %697 = vmatpush1.bf16.msra.mxu0 %v681
    %698 = vmatprep.subr.bf16.mxu0 0
    %699 = vmatpush2.bf16.msra.mxu0 0
    %700 = vmatprep.subr.bf16.mxu0 0
    %701 = vmatpush2.bf16.msra.mxu0 0
    %702 = vmatprep.subr.bf16.mxu0 0
    %703 = vmatpush2.bf16.msra.mxu0 0
    %704 = vmatprep.subr.bf16.mxu0 0
    %705 = vmatpush2.bf16.msra.mxu0 0
    %706 = vmatprep.subr.bf16.mxu0 0
    %707 = vmatpush2.bf16.msra.mxu0 0
    %708 = vmatprep.subr.bf16.mxu0 0
    %709 = vmatpush2.bf16.msra.mxu0 0
    %710 = vmatprep.subr.bf16.mxu0 0
    %711 = vmatpush2.bf16.msra.mxu0 0
    %712 = vmatprep.subr.bf16.mxu0 0
    %713 = vmatpush2.bf16.msra.mxu0 0
    %714 = vmatprep.mubr.bf16.mxu0 0
    %715 = vmatmul.mubr.bf16.gmra.mxu0 %v99
    %v716 = vpop.f32.mrf.mxu0
    %v717 = vadd.f32 %v76, %v716
    %v718 = vpop.f32.mrf.mxu0
    %v719 = vpop.f32.mrf.mxu0
    %v720 = vadd.f32 %v77, %v719
    %v721 = vpop.f32.mrf.mxu0
    %722 = vmatprep.mubr.bf16.mxu0 0
    %723 = vmatmul.mubr.bf16.gmra.mxu0 %v102
    %v724 = vpop.f32.mrf.mxu0
    %v725 = vadd.f32 %v78, %v724
    %v726 = vpop.f32.mrf.mxu0
    %v727 = vpop.f32.mrf.mxu0
    %v728 = vadd.f32 %v79, %v727
    %v729 = vpop.f32.mrf.mxu0
    %730 = vmatprep.mubr.bf16.mxu0 0
    %731 = vmatmul.mubr.bf16.gmra.mxu0 %v105
    %v732 = vpop.f32.mrf.mxu0
    %v733 = vadd.f32 %v80, %v732
    %v734 = vpop.f32.mrf.mxu0
    %v735 = vpop.f32.mrf.mxu0
    %v736 = vadd.f32 %v81, %v735
    %v737 = vpop.f32.mrf.mxu0
    %738 = vdwg.mxu0
    %v739 = vmax.f32 %v717, 0.0
    %v740 = vmax.f32 %v720, 0.0
    %v741 = vmax.f32 %v725, 0.0
    %v742 = vmax.f32 %v728, 0.0
    %v743 = vmax.f32 %v733, 0.0
    %v744 = vmax.f32 %v736, 0.0
    %v745 = vadd.f32 %v739, 1e-07
    %v746 = vadd.f32 %v740, 1e-07
    %v747 = vadd.f32 %v741, 1e-07
    %v748 = vadd.f32 %v742, 1e-07
    %v749 = vadd.f32 %v743, 1e-07
    %v750 = vadd.f32 %v744, 1e-07
    %s751 = sld [smem:[#allocation2 + $0x2]]
    %v752 = vstv %s751
    %v753 = vmul.f32 %v752, %v745
    %v754 = vmul.f32 %v752, %v746
    %v755 = vmul.f32 %v752, %v747
    %v756 = vmul.f32 %v752, %v748
    %v757 = vmul.f32 %v752, %v749
    %v758 = vmul.f32 %v752, %v750
    %v759 = vmin.f32 %v753, 80.0
    %v760 = vmin.f32 %v754, 80.0
    %v761 = vmin.f32 %v755, 80.0
    %v762 = vmin.f32 %v756, 80.0
    %v763 = vmin.f32 %v757, 80.0
    %v764 = vmin.f32 %v758, 80.0
    %v765 = vmul.f32 %v759, 1.442695
    %v766 = vpow.pop %v765
    %v767 = vmul.f32 %v760, 1.442695
    %v768 = vpow.pop %v767
    %v769 = vmul.f32 %v761, 1.442695
    %v770 = vpow.pop %v769
    %v771 = vmul.f32 %v762, 1.442695
    %v772 = vpow.pop %v771
    %v773 = vmul.f32 %v763, 1.442695
    %v774 = vpow.pop %v773
    %v775 = vmul.f32 %v764, 1.442695
    %v776 = vpow.pop %v775
    %v777 = vpack.c.bf16 %v768, %v766
    %v778 = vpack.c.bf16 %v772, %v770
    %v779 = vpack.c.bf16 %v776, %v774
    %v780 = vmul.f32 %v766, %v745
    %v781 = vmul.f32 %v768, %v746
    %v782 = vmul.f32 %v770, %v747
    %v783 = vmul.f32 %v772, %v748
    %v784 = vmul.f32 %v774, %v749
    %v785 = vmul.f32 %v776, %v750
    %v786 = vpack.c.bf16 %v781, %v780
    %v787 = vpack.c.bf16 %v783, %v782
    %v788 = vpack.c.bf16 %v785, %v784
    %789 = vmatprep.subr.bf16.mxu0 0
    %790 = vmatpush1.bf16.msra.mxu0 0
    %791 = vmatprep.subr.bf16.mxu0 0
    %792 = vmatpush1.bf16.msra.mxu0 0
    %793 = vmatprep.subr.bf16.mxu0 0
    %794 = vmatpush1.bf16.msra.mxu0 0
    %795 = vmatprep.subr.bf16.mxu0 0
    %796 = vmatpush1.bf16.msra.mxu0 0
    %797 = vmatprep.subr.bf16.mxu0 0
    %798 = vmatpush1.bf16.msra.mxu0 0
    %799 = vmatprep.subr.bf16.mxu0 %v788
    %800 = vmatpush1.bf16.msra.mxu0 %v779
    %801 = vmatprep.subr.bf16.mxu0 %v787
    %802 = vmatpush1.bf16.msra.mxu0 %v778
    %803 = vmatprep.subr.bf16.mxu0 %v786
    %804 = vmatpush1.bf16.msra.mxu0 %v777
    %805 = vmatprep.subr.bf16.mxu0 0
    %806 = vmatpush2.bf16.msra.mxu0 0
    %807 = vmatprep.subr.bf16.mxu0 0
    %808 = vmatpush2.bf16.msra.mxu0 0
    %809 = vmatprep.subr.bf16.mxu0 0
    %810 = vmatpush2.bf16.msra.mxu0 0
    %811 = vmatprep.subr.bf16.mxu0 0
    %812 = vmatpush2.bf16.msra.mxu0 0
    %813 = vmatprep.subr.bf16.mxu0 0
    %814 = vmatpush2.bf16.msra.mxu0 0
    %815 = vmatprep.subr.bf16.mxu0 0
    %816 = vmatpush2.bf16.msra.mxu0 0
    %817 = vmatprep.subr.bf16.mxu0 0
    %818 = vmatpush2.bf16.msra.mxu0 0
    %819 = vmatprep.subr.bf16.mxu0 0
    %820 = vmatpush2.bf16.msra.mxu0 0
    %821 = vmatprep.mubr.bf16.mxu0 0
    %822 = vmatmul.mubr.bf16.gmra.mxu0 %v223
    %v823 = vpop.f32.mrf.mxu0
    %v824 = vadd.f32 0.0, %v823
    %v825 = vpop.f32.mrf.mxu0
    %v826 = vadd.f32 0.0, %v825
    %v827 = vpop.f32.mrf.mxu0
    %v828 = vadd.f32 0.0, %v827
    %v829 = vpop.f32.mrf.mxu0
    %v830 = vadd.f32 0.0, %v829
    %831 = vdwg.mxu0
    %v832 = vmax.f32 %v824, 1e-16
    %v833 = vmax.f32 %v828, 1e-16
    %v834 = vrcp.pop %v832
    %v835 = vmul.f32 %v826, %v834
    %v836 = vrcp.pop %v833
    %v837 = vmul.f32 %v830, %v836
    %v838 = vadd.f32 %v835, %v679
    %v839 = vadd.f32 %v837, %v680
    %s840 = scalar_lea.vmem %s6, 256
    %v841 = vld [vmem:[%s840] sm:$0xff]
    %v842 = vld [vmem:[%s840 + $0x8] sm:$0xff]
    %v843 = vld [vmem:[%s840 + $0x10] sm:$0xff]
    %v844 = vld [vmem:[%s840 + $0x18] sm:$0xff]
    %v845 = vld [vmem:[%s840 + $0x20] sm:$0xff]
    %v846 = vld [vmem:[%s840 + $0x28] sm:$0xff]
    %v847 = vld [vmem:[%s840 + $0x30] sm:$0xff]
    %v848 = vld [vmem:[%s840 + $0x38] sm:$0xff]
    %v849 = vld [vmem:[%s840 + $0x40] sm:$0xff]
    %v850 = vld [vmem:[%s840 + $0x48] sm:$0xff]
    %v851 = vld [vmem:[%s840 + $0x50] sm:$0xff]
    %v852 = vld [vmem:[%s840 + $0x58] sm:$0xff]
    %v853 = vld [vmem:[%s840 + $0x60] sm:$0xff]
    %v854 = vld [vmem:[%s840 + $0x68] sm:$0xff]
    %v855 = vld [vmem:[%s840 + $0x70] sm:$0xff]
    %v856 = vld [vmem:[%s840 + $0x78] sm:$0xff]
    %s857 = scalar_lea.vmem %s7, 2
    %v858 = vld [vmem:[%s857] sm:$0x1]
    %v860 = vlaneseq
    %v861 = vshrl.u32 %v860, 7
    %v862 = vsub.s32 0, %v861
    %v863 = vrot.slane %v858, %v862
    %865 = vmatprep.subr.mxu0 0.0
    %866 = vmatpush1.msra.mxu0 %v856
    %867 = vmatprep.subr.mxu0 0.0
    %868 = vmatpush1.msra.mxu0 %v855
    %869 = vmatprep.subr.mxu0 0.0
    %870 = vmatpush1.msra.mxu0 %v854
    %871 = vmatprep.subr.mxu0 0.0
    %872 = vmatpush1.msra.mxu0 %v853
    %873 = vmatprep.subr.mxu0 0.0
    %874 = vmatpush1.msra.mxu0 %v852
    %875 = vmatprep.subr.mxu0 0.0
    %876 = vmatpush1.msra.mxu0 %v851
    %877 = vmatprep.subr.mxu0 0.0
    %878 = vmatpush1.msra.mxu0 %v850
    %879 = vmatprep.subr.mxu0 0.0
    %880 = vmatpush1.msra.mxu0 %v849
    %881 = vmatprep.subr.mxu0 0.0
    %882 = vmatpush1.msra.mxu0 %v848
    %883 = vmatprep.subr.mxu0 0.0
    %884 = vmatpush1.msra.mxu0 %v847
    %885 = vmatprep.subr.mxu0 0.0
    %886 = vmatpush1.msra.mxu0 %v846
    %887 = vmatprep.subr.mxu0 0.0
    %888 = vmatpush1.msra.mxu0 %v845
    %889 = vmatprep.subr.mxu0 0.0
    %890 = vmatpush1.msra.mxu0 %v844
    %891 = vmatprep.subr.mxu0 0.0
    %892 = vmatpush1.msra.mxu0 %v843
    %893 = vmatprep.subr.mxu0 0.0
    %894 = vmatpush1.msra.mxu0 %v842
    %895 = vmatprep.subr.mxu0 0.0
    %896 = vmatpush1.msra.mxu0 %v841
    %897 = vmatprep.subr.mxu0 0.0
    %898 = vmatpush2.msra.mxu0 0.0
    %899 = vmatprep.subr.mxu0 0.0
    %900 = vmatpush2.msra.mxu0 0.0
    %901 = vmatprep.subr.mxu0 0.0
    %902 = vmatpush2.msra.mxu0 0.0
    %903 = vmatprep.subr.mxu0 0.0
    %904 = vmatpush2.msra.mxu0 0.0
    %905 = vmatprep.subr.mxu0 0.0
    %906 = vmatpush2.msra.mxu0 0.0
    %907 = vmatprep.subr.mxu0 0.0
    %908 = vmatpush2.msra.mxu0 0.0
    %909 = vmatprep.subr.mxu0 0.0
    %910 = vmatpush2.msra.mxu0 0.0
    %911 = vmatprep.subr.mxu0 0.0
    %912 = vmatpush2.msra.mxu0 0.0
    %913 = vmatprep.subr.mxu0 0.0
    %914 = vmatpush2.msra.mxu0 0.0
    %915 = vmatprep.subr.mxu0 0.0
    %916 = vmatpush2.msra.mxu0 0.0
    %917 = vmatprep.subr.mxu0 0.0
    %918 = vmatpush2.msra.mxu0 0.0
    %919 = vmatprep.subr.mxu0 0.0
    %920 = vmatpush2.msra.mxu0 0.0
    %921 = vmatprep.subr.mxu0 0.0
    %922 = vmatpush2.msra.mxu0 0.0
    %923 = vmatprep.subr.mxu0 0.0
    %924 = vmatpush2.msra.mxu0 0.0
    %925 = vmatprep.subr.mxu0 0.0
    %926 = vmatpush2.msra.mxu0 0.0
    %927 = vmatprep.subr.mxu0 0.0
    %928 = vmatpush2.msra.mxu0 0.0
    %929 = vmatprep.mubr.f32.mxu0 0.0
    %930 = vmatmul.mubr.f32.gmra.mxu0 %v838
    %v931 = vpop.f32.mrf.mxu0
    %v932 = vadd.f32 %v863, %v931
    %v933 = vpop.f32.mrf.mxu0
    %934 = vmatprep.mubr.f32.mxu0 0.0
    %935 = vmatmul.mubr.f32.gmra.mxu0 %v839
    %v936 = vpop.f32.mrf.mxu0
    %v937 = vadd.f32 %v863, %v936
    %v938 = vpop.f32.mrf.mxu0
    %939 = vdwg.mxu0
    %v940 = vadd.f32 %v657, %v932
    %v941 = vadd.f32 %v658, %v937
    %v942 = vmul.f32 %v940, %v54
    %v943 = vmul.f32 %v941, %v54
    %v944 = vadd.f32 %v942, %v63
    %v945 = vadd.f32 %v943, %v63
    %v946 = vmax.f32 %v944, 0.0
    %v947 = vmax.f32 %v945, 0.0
    %948 = vst [vmem:[#allocation5] sm:$0xff] %v946
    %949 = vst [vmem:[#allocation5 + $0x8] sm:$0xff] %v947
    // Predicated region
    $region42: #{deepergcn_forward.1} parent=1 // pred_check
      _
    $region43: #{deepergcn_forward.1} parent=1 // pred_check_branch
      %951 = sbr.rel (0) target = $region45
    $region44: #{deepergcn_forward.1} parent=1 // pred_region
      %s953 = ssub.s32 256, 256
      %954 = vsyncadd [#allocation3], %s953
      %s955 = sshll.u32 [#allocation5], 4
      %s956 = int_to_ptr.vmem [resolvable:$true] %s955
      %961 = dma.vmem_to_hbm [thread:$0]  %s956, 256, %s9, [#allocation3], 128, 128, 8
    $region45: #{deepergcn_forward.1} parent=1 // pred_fallthru
      _
    // Predicated region
    $region46: #{deepergcn_forward.1} parent=1 // pred_check
      _
    $region47: #{deepergcn_forward.1} parent=1 // pred_check_branch
      %963 = sbr.rel (0) target = $region49
    $region48: #{deepergcn_forward.1} parent=1 // pred_region
      %964 = dma.done [#allocation3], 256
    $region49: #{deepergcn_forward.1} parent=1 // pred_fallthru
      _
    %965 = vsyncpa [#allocation3], 1
    %966 = vsyncpa [#allocation4], 1

</llo_original>
